<compile_context>
chip_gen: v7x
topology: tpu7x:2x2x1
jax: 0.10.0
libtpu: 0.0.40
codegen_flags: <defaults>
</compile_context>

<pallas_src>
import functools

import jax
import jax.numpy as jnp
from jax.experimental import pallas as pl
from jax.experimental.pallas import tpu as pltpu

_LANE = 128
_SUBLANE = 8
_NODE_BUCKET = 128   # node-count bucket: recompile-free across batch sizes,
                     # full MXU contraction depth for the pooling matmul.


def _round_up(n, m):
    return ((n + m - 1) // m) * m


# ----------------------------------------------------------------------------
# Fused kernel: segment-mean pool + fc1/relu + fc2/relu + fc3 + log_softmax
# ----------------------------------------------------------------------------
def fused_mlp_kernel(batch_ref, x_ref, w1_ref, b1_ref, w2_ref, b2_ref,
                     w3_ref, b3_ref, out_ref, *, ones_col):
    """
    batch_ref: [1, Np] int32  graph id per node (-1 on padded nodes)
    x_ref:     [Np, Fp] f32   node features, zero-padded; column `ones_col`
                              is all ones (counts folded into the pooling dot)
    w*_ref:    lane-padded weights (compute dtype); b*_ref: [1, *] f32 biases
               (b3 carries -1e30 on padded class lanes -> mask is pre-baked)
    out_ref:   [Gp, Cp] f32   padded log-probs (rows >= G / lanes >= C junk)
    """
    x = x_ref[...]                                   # [Np, Fp] f32
    b = batch_ref[...]                               # [1, Np]
    Gp = out_ref.shape[0]
    Np = x.shape[0]

    # ---- global mean pool: (Gp x Np) one-hot @ [x | 1] -> sums AND counts in
    #      one f32 MXU matmul (ones column lives in the lane padding).
    graph_ids = jax.lax.broadcasted_iota(jnp.int32, (Gp, Np), 0)
    onehot = (graph_ids == b).astype(jnp.float32)    # [Gp, Np]
    sums = jnp.dot(onehot, x, preferred_element_type=jnp.float32)   # [Gp, Fp]
    counts = sums[:, ones_col:ones_col + 1]          # [Gp, 1]
    inv = pl.reciprocal(jnp.maximum(counts, 1.0), approx=False)     # exact
    pooled = sums * inv                              # [Gp, Fp] f32

    # ---- MLP: operands in compute dtype, accumulation + epilogue in f32
    w1 = w1_ref[...]
    cd = w1.dtype
    h = jnp.dot(pooled.astype(cd), w1, preferred_element_type=jnp.float32)
    h = jnp.maximum(h + b1_ref[...], 0.0)
    h = jnp.dot(h.astype(cd), w2_ref[...], preferred_element_type=jnp.float32)
    h = jnp.maximum(h + b2_ref[...], 0.0)
    logits = jnp.dot(h.astype(cd), w3_ref[...], preferred_element_type=jnp.float32)
    logits = logits + b3_ref[...]     # padded class lanes already at -1e30

    # ---- log_softmax (padded lanes contribute exp()->0; no in-kernel mask)
    m = jnp.max(logits, axis=-1, keepdims=True)
    shifted = logits - m
    lse = jnp.log(jnp.sum(jnp.exp(shifted), axis=-1, keepdims=True))
    out_ref[...] = shifted - lse                     # single full-width store


# ----------------------------------------------------------------------------
# One-time parameter preparation (pad + cast hoisted out of the forward call)
# ----------------------------------------------------------------------------
def prepare_params(params, *, compute_dtype=jnp.float32):
    """compute_dtype=jnp.bfloat16 halves weight DMA bytes and feeds the MXU at
    native operand width on v5e/v6e/v7x; accumulation and the elementwise
    epilogue stay f32 on all generations."""
    w1, b1, w2, b2, w3, b3 = params
    F, H = w1.shape
    C = w3.shape[1]
    Fp = _round_up(F + 1, _LANE)      # +1 lane for the appended ones column
    Hp = _round_up(H, _LANE)
    Cp = _round_up(C, _LANE)

    def padw(a, rows, cols):
        a = a.astype(jnp.float32)
        a = jnp.pad(a, ((0, rows - a.shape[0]), (0, cols - a.shape[1])))
        return a.astype(compute_dtype)

    w1p = padw(w1, Fp, Hp)
    w2p = padw(w2, Hp, Hp)
    w3p = padw(w3, Hp, Cp)
    b1p = jnp.pad(b1.astype(jnp.float32), ((0, 0), (0, Hp - H)))
    b2p = jnp.pad(b2.astype(jnp.float32), ((0, 0), (0, Hp - H)))
    # Bake the class-padding mask into fc3's bias.
    b3p = jnp.pad(b3.astype(jnp.float32), ((0, 0), (0, Cp - C)),
                  constant_values=-1e30)

    meta = {"F": F, "H": H, "C": C, "Fp": Fp, "Hp": Hp, "Cp": Cp}
    return (w1p, b1p, w2p, b2p, w3p, b3p), meta


def _pad_inputs(x, batch, F, Fp):
    N = x.shape[0]
    Np = _round_up(max(N, 1), _NODE_BUCKET)
    x_aug = jnp.concatenate(
        [x.astype(jnp.float32), jnp.ones((N, 1), jnp.float32)], axis=1)
    x_aug = jnp.pad(x_aug, ((0, Np - N), (0, Fp - (F + 1))))
    batch_p = jnp.pad(batch.astype(jnp.int32), (0, Np - N),
                      constant_values=-1).reshape(1, Np)
    return x_aug, batch_p, Np


# ----------------------------------------------------------------------------
# Single-graph-batch forward (gridless fused call)
# ----------------------------------------------------------------------------
def baseline_mlp_forward(x, batch, num_graphs, prepared):
    (w1p, b1p, w2p, b2p, w3p, b3p), meta = prepared
    F, C, Fp, Cp = meta["F"], meta["C"], meta["Fp"], meta["Cp"]
    Gp = _round_up(num_graphs, _SUBLANE)

    x_aug, batch_p, _ = _pad_inputs(x, batch, F, Fp)

    kernel = functools.partial(fused_mlp_kernel, ones_col=F)
    vmem = pl.BlockSpec(memory_space=pltpu.MemorySpace.VMEM)

    out_padded = pl.pallas_call(
        kernel,
        out_shape=jax.ShapeDtypeStruct((Gp, Cp), jnp.float32),
        in_specs=[vmem] * 8,
        out_specs=vmem,
    )(batch_p, x_aug, w1p, b1p, w2p, b2p, w3p, b3p)

    return out_padded[:num_graphs, :C]


# ----------------------------------------------------------------------------
# Multi-batch forward: leading "parallel" grid axis (uses both v7x TCs),
# constant weight index_maps (weights DMA'd once, VMEM-resident).
# ----------------------------------------------------------------------------
def baseline_mlp_forward_batched(x_stack, batch_stack, num_graphs, prepared):
    """x_stack: [B, N, F] node features; batch_stack: [B, N] graph ids."""
    (w1p, b1p, w2p, b2p, w3p, b3p), meta = prepared
    F, C, Fp, Hp, Cp = meta["F"], meta["C"], meta["Fp"], meta["Hp"], meta["Cp"]
    B, N, _ = x_stack.shape
    Np = _round_up(max(N, 1), _NODE_BUCKET)
    Gp = _round_up(num_graphs, _SUBLANE)

    x_aug = jnp.concatenate(
        [x_stack.astype(jnp.float32), jnp.ones((B, N, 1), jnp.float32)], axis=2)
    x_aug = jnp.pad(x_aug, ((0, 0), (0, Np - N), (0, Fp - (F + 1))))
    batch_p = jnp.pad(batch_stack.astype(jnp.int32),
                      ((0, 0), (0, Np - N)), constant_values=-1)
    batch_p = batch_p.reshape(B, 1, Np)

    kernel = functools.partial(fused_mlp_kernel, ones_col=F)

    out_padded = pl.pallas_call(
        kernel,
        out_shape=jax.ShapeDtypeStruct((B, Gp, Cp), jnp.float32),
        grid=(B,),
        in_specs=[
            pl.BlockSpec((None, 1, Np), lambda bi: (bi, 0, 0)),
            pl.BlockSpec((None, Np, Fp), lambda bi: (bi, 0, 0)),
            pl.BlockSpec((Fp, Hp), lambda bi: (0, 0)),   # weights: constant
            pl.BlockSpec((1, Hp), lambda bi: (0, 0)),    #   index_map -> DMA'd
            pl.BlockSpec((Hp, Hp), lambda bi: (0, 0)),   #   once, VMEM-resident
            pl.BlockSpec((1, Hp), lambda bi: (0, 0)),
            pl.BlockSpec((Hp, Cp), lambda bi: (0, 0)),
            pl.BlockSpec((1, Cp), lambda bi: (0, 0)),
        ],
        out_specs=pl.BlockSpec((None, Gp, Cp), lambda bi: (bi, 0, 0)),
        compiler_params=pltpu.CompilerParams(
            dimension_semantics=("parallel",)),
    )(batch_p, x_aug, w1p, b1p, w2p, b2p, w3p, b3p)

    return out_padded[:, :num_graphs, :C]


# ----------------------------------------------------------------------------
# Deterministic parameter init (mimics torch.nn.Linear's U(-1/sqrt(in), +)).
# Weights stored transposed, i.e. [in_features, out_features].
# ----------------------------------------------------------------------------
def init_params(key, num_node_features, hidden_dim, num_classes):
    def linear(k, fan_in, fan_out):
        kw, kb = jax.random.split(k)
        bound = 1.0 / jnp.sqrt(fan_in)
        w = jax.random.uniform(kw, (fan_in, fan_out), jnp.float32, -bound, bound)
        b = jax.random.uniform(kb, (1, fan_out), jnp.float32, -bound, bound)
        return w, b

    k1, k2, k3 = jax.random.split(key, 3)
    w1, b1 = linear(k1, num_node_features, hidden_dim)
    w2, b2 = linear(k2, hidden_dim, hidden_dim)
    w3, b3 = linear(k3, hidden_dim, num_classes)
    return (w1, b1, w2, b2, w3, b3)


# ----------------------------------------------------------------------------
# Pure-JAX reference for sanity checking
# ----------------------------------------------------------------------------
def reference_forward(x, batch, num_graphs, params):
    w1, b1, w2, b2, w3, b3 = params
    sums = jax.ops.segment_sum(x, batch, num_segments=num_graphs)
    counts = jax.ops.segment_sum(jnp.ones((x.shape[0],), jnp.float32), batch,
                                 num_segments=num_graphs)
    pooled = sums / jnp.maximum(counts, 1.0)[:, None]
    h = jax.nn.relu(pooled @ w1 + b1)
    h = jax.nn.relu(h @ w2 + b2)
    logits = h @ w3 + b3
    return jax.nn.log_softmax(logits, axis=1)


if __name__ == "__main__":
    num_node_features = 16
    hidden_dim = 32
    num_classes = 8
    num_nodes = 64
    num_graphs = 4

    key = jax.random.PRNGKey(0)
    kx, kb, kx2, kb2, kp = jax.random.split(key, 5)

    def make_batch_assignment(k):
        b = jnp.sort(jax.random.randint(k, (num_nodes,), 0, num_graphs))
        b = b.at[:num_graphs].set(jnp.arange(num_graphs, dtype=jnp.int32))
        return jnp.sort(b).astype(jnp.int32)

    x = jax.random.normal(kx, (num_nodes, num_node_features), jnp.float32)
    batch = make_batch_assignment(kb)
    x2 = jax.random.normal(kx2, (num_nodes, num_node_features), jnp.float32)
    batch2 = make_batch_assignment(kb2)

    params = init_params(kp, num_node_features, hidden_dim, num_classes)
    ref = reference_forward(x, batch, num_graphs, params)
    ref2 = reference_forward(x2, batch2, num_graphs, params)

    # ---- f32 path (single graph-batch): tight match vs pure-JAX reference.
    prepared_f32 = prepare_params(params, compute_dtype=jnp.float32)
    out_f32 = baseline_mlp_forward(x, batch, num_graphs, prepared_f32)
    out_f32 = jax.block_until_ready(out_f32)
    assert out_f32.shape == (num_graphs, num_classes)
    assert jnp.allclose(out_f32, ref, atol=1e-5, rtol=1e-5), "f32 mismatch"

    # ---- bf16-operand path (valid on v5e/v6e/v7x): pooling stays exact f32,
    #      only the MLP matmul operands are bf16 -> much tighter than before.
    prepared_bf16 = prepare_params(params, compute_dtype=jnp.bfloat16)
    out_bf16 = baseline_mlp_forward(x, batch, num_graphs, prepared_bf16)
    out_bf16 = jax.block_until_ready(out_bf16)
    assert out_bf16.shape == (num_graphs, num_classes)
    assert jnp.allclose(out_bf16, ref, atol=1e-1, rtol=1e-1), "bf16 mismatch"

    # ---- batched path (grid over graph-batches, parallel axis, resident W).
    x_stack = jnp.stack([x, x2], axis=0)
    batch_stack = jnp.stack([batch, batch2], axis=0)
    out_b = baseline_mlp_forward_batched(x_stack, batch_stack, num_graphs,
                                         prepared_f32)
    out_b = jax.block_until_ready(out_b)
    assert out_b.shape == (2, num_graphs, num_classes)
    assert jnp.allclose(out_b[0], ref, atol=1e-5, rtol=1e-5), "batched[0] mismatch"
    assert jnp.allclose(out_b[1], ref2, atol=1e-5, rtol=1e-5), "batched[1] mismatch"

    print("KERNEL_OK")
</pallas_src>

<mosaic_0001>
module attributes {stable_mosaic.version = 11 : i64} {
  func.func @fused_mlp_kernel(%arg0: memref<1x128xi32, #tpu.memory_space<vmem>>, %arg1: memref<128x128xf32, #tpu.memory_space<vmem>>, %arg2: memref<128x128xf32, #tpu.memory_space<vmem>>, %arg3: memref<1x128xf32, #tpu.memory_space<vmem>>, %arg4: memref<128x128xf32, #tpu.memory_space<vmem>>, %arg5: memref<1x128xf32, #tpu.memory_space<vmem>>, %arg6: memref<128x128xf32, #tpu.memory_space<vmem>>, %arg7: memref<1x128xf32, #tpu.memory_space<vmem>>, %arg8: memref<8x128xf32, #tpu.memory_space<vmem>>) attributes {dimension_semantics = [], scalar_prefetch = 0 : i64, scratch_operands = 0 : i64, tpu.core_type = #tpu.core_type<tc>} {
    %c0 = arith.constant 0 : index
    %c0_0 = arith.constant 0 : index
    %0 = vector.load %arg1[%c0, %c0_0] : memref<128x128xf32, #tpu.memory_space<vmem>>, vector<128x128xf32>
    %c0_1 = arith.constant 0 : index
    %c0_2 = arith.constant 0 : index
    %1 = vector.load %arg0[%c0_1, %c0_2] : memref<1x128xi32, #tpu.memory_space<vmem>>, vector<1x128xi32>
    %2 = tpu.iota {dimensions = array<i32: 0>} : vector<8x128xi32>
    %3 = vector.broadcast %1 : vector<1x128xi32> to vector<8x128xi32>
    %4 = arith.cmpi eq, %2, %3 : vector<8x128xi32>
    %5 = arith.extui %4 : vector<8x128xi1> to vector<8x128xi32>
    %6 = arith.sitofp %5 : vector<8x128xi32> to vector<8x128xf32>
    %cst = arith.constant dense<0.000000e+00> : vector<8x128xf32>
    %7 = tpu.matmul %6, %0, %cst {dimension_numbers = #tpu.dot_dimension_numbers<[1], [0], [0], [1], [0, 0, 1, 1], [], []>} : vector<8x128xf32>, vector<128x128xf32>, vector<8x128xf32> -> vector<8x128xf32>
    %8 = vector.extract_strided_slice %7 {offsets = [0, 16], sizes = [8, 1], strides = [1, 1]} : vector<8x128xf32> to vector<8x1xf32>
    %cst_3 = arith.constant 1.000000e+00 : f32
    %9 = vector.broadcast %cst_3 : f32 to vector<8x1xf32>
    %10 = arith.maximumf %8, %9 : vector<8x1xf32>
    %11 = tpu.reciprocal %10 : vector<8x1xf32> -> vector<8x1xf32>
    %12 = vector.broadcast %11 : vector<8x1xf32> to vector<8x128xf32>
    %13 = arith.mulf %7, %12 : vector<8x128xf32>
    %c0_4 = arith.constant 0 : index
    %c0_5 = arith.constant 0 : index
    %14 = vector.load %arg2[%c0_4, %c0_5] : memref<128x128xf32, #tpu.memory_space<vmem>>, vector<128x128xf32>
    %cst_6 = arith.constant dense<0.000000e+00> : vector<8x128xf32>
    %15 = tpu.matmul %13, %14, %cst_6 {dimension_numbers = #tpu.dot_dimension_numbers<[1], [0], [0], [1], [0, 0, 1, 1], [], []>} : vector<8x128xf32>, vector<128x128xf32>, vector<8x128xf32> -> vector<8x128xf32>
    %c0_7 = arith.constant 0 : index
    %c0_8 = arith.constant 0 : index
    %16 = vector.load %arg3[%c0_7, %c0_8] : memref<1x128xf32, #tpu.memory_space<vmem>>, vector<1x128xf32>
    %17 = vector.broadcast %16 : vector<1x128xf32> to vector<8x128xf32>
    %18 = arith.addf %15, %17 : vector<8x128xf32>
    %cst_9 = arith.constant 0.000000e+00 : f32
    %19 = vector.broadcast %cst_9 : f32 to vector<8x128xf32>
    %20 = arith.maximumf %18, %19 : vector<8x128xf32>
    %c0_10 = arith.constant 0 : index
    %c0_11 = arith.constant 0 : index
    %21 = vector.load %arg4[%c0_10, %c0_11] : memref<128x128xf32, #tpu.memory_space<vmem>>, vector<128x128xf32>
    %cst_12 = arith.constant dense<0.000000e+00> : vector<8x128xf32>
    %22 = tpu.matmul %20, %21, %cst_12 {dimension_numbers = #tpu.dot_dimension_numbers<[1], [0], [0], [1], [0, 0, 1, 1], [], []>} : vector<8x128xf32>, vector<128x128xf32>, vector<8x128xf32> -> vector<8x128xf32>
    %c0_13 = arith.constant 0 : index
    %c0_14 = arith.constant 0 : index
    %23 = vector.load %arg5[%c0_13, %c0_14] : memref<1x128xf32, #tpu.memory_space<vmem>>, vector<1x128xf32>
    %24 = vector.broadcast %23 : vector<1x128xf32> to vector<8x128xf32>
    %25 = arith.addf %22, %24 : vector<8x128xf32>
    %cst_15 = arith.constant 0.000000e+00 : f32
    %26 = vector.broadcast %cst_15 : f32 to vector<8x128xf32>
    %27 = arith.maximumf %25, %26 : vector<8x128xf32>
    %c0_16 = arith.constant 0 : index
    %c0_17 = arith.constant 0 : index
    %28 = vector.load %arg6[%c0_16, %c0_17] : memref<128x128xf32, #tpu.memory_space<vmem>>, vector<128x128xf32>
    %cst_18 = arith.constant dense<0.000000e+00> : vector<8x128xf32>
    %29 = tpu.matmul %27, %28, %cst_18 {dimension_numbers = #tpu.dot_dimension_numbers<[1], [0], [0], [1], [0, 0, 1, 1], [], []>} : vector<8x128xf32>, vector<128x128xf32>, vector<8x128xf32> -> vector<8x128xf32>
    %c0_19 = arith.constant 0 : index
    %c0_20 = arith.constant 0 : index
    %30 = vector.load %arg7[%c0_19, %c0_20] : memref<1x128xf32, #tpu.memory_space<vmem>>, vector<1x128xf32>
    %31 = vector.broadcast %30 : vector<1x128xf32> to vector<8x128xf32>
    %32 = arith.addf %29, %31 : vector<8x128xf32>
    %cst_21 = arith.constant dense<0xFF800000> : vector<8xf32>
    %33 = vector.multi_reduction <maximumf>, %32, %cst_21 [1] : vector<8x128xf32> to vector<8xf32>
    %34 = vector.shape_cast %33 : vector<8xf32> to vector<8x1xf32>
    %35 = vector.broadcast %34 : vector<8x1xf32> to vector<8x128xf32>
    %36 = arith.subf %32, %35 : vector<8x128xf32>
    %37 = math.exp %36 : vector<8x128xf32>
    %cst_22 = arith.constant dense<0.000000e+00> : vector<8xf32>
    %38 = vector.multi_reduction <add>, %37, %cst_22 [1] : vector<8x128xf32> to vector<8xf32>
    %39 = vector.shape_cast %38 : vector<8xf32> to vector<8x1xf32>
    %40 = math.log %39 : vector<8x1xf32>
    %41 = vector.broadcast %40 : vector<8x1xf32> to vector<8x128xf32>
    %42 = arith.subf %36, %41 : vector<8x128xf32>
    %c0_23 = arith.constant 0 : index
    %c0_24 = arith.constant 0 : index
    %43 = vector.load %arg8[%c0_23, %c0_24] : memref<8x128xf32, #tpu.memory_space<vmem>>, vector<8x128xf32>
    tpu.vector_store %arg8[%c0_23, %c0_24], %42 {strides = array<i32>} : memref<8x128xf32, #tpu.memory_space<vmem>>, vector<8x128xf32>,
    return
  }
}

</mosaic_0001>

<llo_original>
// kernel: tpu_custom_call.1
$region0: #{tpu_custom_call.1}
  #allocation0 [shape = 'u32[]', space=smem, size = 0x4, offset = 0x4, fixed_abs, tag = 'smem constant byte address 0x4 - core index']
  #allocation1 [shape = 'u32[144,128]{1,0:T(1,128)}', space=vmem, size = 0x12000, scoped, tag = 'internal scratch']
  %s0 = inlined_call_operand.hbm [shape: s32[1,128], index: 0, kind: input, shape index: {}]
  %s1 = inlined_call_operand.hbm [shape: f32[128,128], index: 1, kind: input, shape index: {}]
  %s2 = inlined_call_operand.hbm [shape: f32[128,128], index: 2, kind: input, shape index: {}]
  %s3 = inlined_call_operand.vmem [shape: f32[1,128], index: 3, kind: input, shape index: {}]
  %s4 = inlined_call_operand.hbm [shape: f32[128,128], index: 4, kind: input, shape index: {}]
  %s5 = inlined_call_operand.vmem [shape: f32[1,128], index: 5, kind: input, shape index: {}]
  %s6 = inlined_call_operand.hbm [shape: f32[128,128], index: 6, kind: input, shape index: {}]
  %s7 = inlined_call_operand.vmem [shape: f32[1,128], index: 7, kind: input, shape index: {}]
  %s8 = inlined_call_operand.hbm [shape: f32[8,128], index: 8, kind: output, shape index: {}]
  %s9 = sld [smem:[#allocation0]]
  $region62: #{tpu_custom_call.1} parent=0
    _
  %s11 = ssub.s32 1, %s9
  %s12 = scalar_select 0, %s11, %s9
  $region1: #{tpu_custom_call.1} parent=0
    #allocation2 [shape = 'u8[512]{0}', space=vmem, size = 0x400, scoped, tag = 'input window, operand 0, single buffered']
    #allocation3 [shape = 's32[1]{0}', space=sflag, size = 0x4, scoped, tag = 'scoped memory for tpu_custom_call.1']
    #allocation4 [shape = 's32[1]{0}', space=sflag, size = 0x4, scoped, tag = 'scoped memory for tpu_custom_call.1']
    #allocation5 [shape = 'u8[65536]{0}', space=vmem, size = 0x10000, scoped, tag = 'input window, operand 1, single buffered']
    #allocation6 [shape = 's32[1]{0}', space=sflag, size = 0x4, scoped, tag = 'scoped memory for tpu_custom_call.1']
    #allocation7 [shape = 'u8[65536]{0}', space=vmem, size = 0x10000, scoped, tag = 'input window, operand 2, single buffered']
    #allocation8 [shape = 'u8[65536]{0}', space=vmem, size = 0x10000, scoped, tag = 'input window, operand 4, single buffered']
    #allocation9 [shape = 's32[1]{0}', space=sflag, size = 0x4, scoped, tag = 'scoped memory for tpu_custom_call.1']
    #allocation10 [shape = 'u8[65536]{0}', space=vmem, size = 0x10000, scoped, tag = 'input window, operand 6, single buffered']
    #allocation11 [shape = 'u8[4096]{0}', space=vmem, size = 0x1000, scoped, tag = 'output window, operand 0, single buffered']
    %13 = vsyncpa [#allocation3], 0
    %14 = vsyncpa [#allocation6], 0
    %15 = vsyncpa [#allocation9], 0
    %16 = vsyncpa [#allocation4], 0
    // Predicated region
    $region2: #{tpu_custom_call.1} parent=1 // pred_check
      _
    $region3: #{tpu_custom_call.1} parent=1 // pred_check_branch
      %18 = sbr.rel (0) target = $region5
    $region4: #{tpu_custom_call.1} parent=1 // pred_region
      %s20 = ssub.s32 16, 16
      %21 = vsyncadd [#allocation3], %s20
      %s23 = sshll.u32 [#allocation2], 4
      %s24 = int_to_ptr.vmem [resolvable:$true] %s23
      %26 = dma.hbm_to_vmem [thread:$0]  %s0, 16, %s24, [#allocation3]
    $region5: #{tpu_custom_call.1} parent=1 // pred_fallthru
      _
    // Predicated region
    $region6: #{tpu_custom_call.1} parent=1 // pred_check
      _
    $region7: #{tpu_custom_call.1} parent=1 // pred_check_branch
      %28 = sbr.rel (0) target = $region9
    $region8: #{tpu_custom_call.1} parent=1 // pred_region
      %s30 = ssub.s32 2048, 2048
      %31 = vsyncadd [#allocation6], %s30
      %s32 = sshll.u32 [#allocation5], 4
      %s33 = int_to_ptr.vmem [resolvable:$true] %s32
      %38 = dma.hbm_to_vmem [thread:$0]  %s1, 2048, %s33, [#allocation6], 128, 128, 8
    $region9: #{tpu_custom_call.1} parent=1 // pred_fallthru
      _
    // Predicated region
    $region10: #{tpu_custom_call.1} parent=1 // pred_check
      _
    $region11: #{tpu_custom_call.1} parent=1 // pred_check_branch
      %40 = sbr.rel (0) target = $region13
    $region12: #{tpu_custom_call.1} parent=1 // pred_region
      %s42 = ssub.s32 2048, 2048
      %43 = vsyncadd [#allocation6], %s42
      %s44 = sshll.u32 [#allocation7], 4
      %s45 = int_to_ptr.vmem [resolvable:$true] %s44
      %50 = dma.hbm_to_vmem [thread:$0]  %s2, 2048, %s45, [#allocation6], 128, 128, 8
    $region13: #{tpu_custom_call.1} parent=1 // pred_fallthru
      _
    // Predicated region
    $region14: #{tpu_custom_call.1} parent=1 // pred_check
      _
    $region15: #{tpu_custom_call.1} parent=1 // pred_check_branch
      %52 = sbr.rel (0) target = $region17
    $region16: #{tpu_custom_call.1} parent=1 // pred_region
      _
    $region17: #{tpu_custom_call.1} parent=1 // pred_fallthru
      _
    // Predicated region
    $region18: #{tpu_custom_call.1} parent=1 // pred_check
      _
    $region19: #{tpu_custom_call.1} parent=1 // pred_check_branch
      %54 = sbr.rel (0) target = $region21
    $region20: #{tpu_custom_call.1} parent=1 // pred_region
      %s56 = ssub.s32 2048, 2048
      %57 = vsyncadd [#allocation9], %s56
      %s58 = sshll.u32 [#allocation8], 4
      %s59 = int_to_ptr.vmem [resolvable:$true] %s58
      %64 = dma.hbm_to_vmem [thread:$0]  %s4, 2048, %s59, [#allocation9], 128, 128, 8
    $region21: #{tpu_custom_call.1} parent=1 // pred_fallthru
      _
    // Predicated region
    $region22: #{tpu_custom_call.1} parent=1 // pred_check
      _
    $region23: #{tpu_custom_call.1} parent=1 // pred_check_branch
      %66 = sbr.rel (0) target = $region25
    $region24: #{tpu_custom_call.1} parent=1 // pred_region
      _
    $region25: #{tpu_custom_call.1} parent=1 // pred_fallthru
      _
    // Predicated region
    $region26: #{tpu_custom_call.1} parent=1 // pred_check
      _
    $region27: #{tpu_custom_call.1} parent=1 // pred_check_branch
      %68 = sbr.rel (0) target = $region29
    $region28: #{tpu_custom_call.1} parent=1 // pred_region
      %s70 = ssub.s32 2048, 2048
      %71 = vsyncadd [#allocation9], %s70
      %s72 = sshll.u32 [#allocation10], 4
      %s73 = int_to_ptr.vmem [resolvable:$true] %s72
      %78 = dma.hbm_to_vmem [thread:$0]  %s6, 2048, %s73, [#allocation9], 128, 128, 8
    $region29: #{tpu_custom_call.1} parent=1 // pred_fallthru
      _
    // Predicated region
    $region30: #{tpu_custom_call.1} parent=1 // pred_check
      _
    $region31: #{tpu_custom_call.1} parent=1 // pred_check_branch
      %80 = sbr.rel (0) target = $region33
    $region32: #{tpu_custom_call.1} parent=1 // pred_region
      _
    $region33: #{tpu_custom_call.1} parent=1 // pred_fallthru
      _
    // Predicated region
    $region34: #{tpu_custom_call.1} parent=1 // pred_check
      _
    $region35: #{tpu_custom_call.1} parent=1 // pred_check_branch
      %82 = sbr.rel (0) target = $region37
    $region36: #{tpu_custom_call.1} parent=1 // pred_region
      %83 = dma.done [#allocation3], 16
    $region37: #{tpu_custom_call.1} parent=1 // pred_fallthru
      _
    // Predicated region
    $region38: #{tpu_custom_call.1} parent=1 // pred_check
      _
    $region39: #{tpu_custom_call.1} parent=1 // pred_check_branch
      %85 = sbr.rel (0) target = $region41
    $region40: #{tpu_custom_call.1} parent=1 // pred_region
      %86 = dma.done [#allocation6], 2048
    $region41: #{tpu_custom_call.1} parent=1 // pred_fallthru
      _
    // Predicated region
    $region42: #{tpu_custom_call.1} parent=1 // pred_check
      _
    $region43: #{tpu_custom_call.1} parent=1 // pred_check_branch
      %88 = sbr.rel (0) target = $region45
    $region44: #{tpu_custom_call.1} parent=1 // pred_region
      %89 = dma.done [#allocation6], 2048
    $region45: #{tpu_custom_call.1} parent=1 // pred_fallthru
      _
    // Predicated region
    $region46: #{tpu_custom_call.1} parent=1 // pred_check
      _
    $region47: #{tpu_custom_call.1} parent=1 // pred_check_branch
      %91 = sbr.rel (0) target = $region49
    $region48: #{tpu_custom_call.1} parent=1 // pred_region
      %92 = dma.done [#allocation9], 2048
    $region49: #{tpu_custom_call.1} parent=1 // pred_fallthru
      _
    // Predicated region
    $region50: #{tpu_custom_call.1} parent=1 // pred_check
      _
    $region51: #{tpu_custom_call.1} parent=1 // pred_check_branch
      %94 = sbr.rel (0) target = $region53
    $region52: #{tpu_custom_call.1} parent=1 // pred_region
      %95 = dma.done [#allocation9], 2048
    $region53: #{tpu_custom_call.1} parent=1 // pred_fallthru
      _
    %v96 = vld [vmem:[#allocation5] sm:$0xff]
    %v97 = vld [vmem:[#allocation5 + $0x8] sm:$0xff]
    %v98 = vld [vmem:[#allocation5 + $0x10] sm:$0xff]
    %v99 = vld [vmem:[#allocation5 + $0x18] sm:$0xff]
    %v100 = vld [vmem:[#allocation5 + $0x20] sm:$0xff]
    %v101 = vld [vmem:[#allocation5 + $0x28] sm:$0xff]
    %v102 = vld [vmem:[#allocation5 + $0x30] sm:$0xff]
    %v103 = vld [vmem:[#allocation5 + $0x38] sm:$0xff]
    %v104 = vld [vmem:[#allocation5 + $0x40] sm:$0xff]
    %v105 = vld [vmem:[#allocation5 + $0x48] sm:$0xff]
    %v106 = vld [vmem:[#allocation5 + $0x50] sm:$0xff]
    %v107 = vld [vmem:[#allocation5 + $0x58] sm:$0xff]
    %v108 = vld [vmem:[#allocation5 + $0x60] sm:$0xff]
    %v109 = vld [vmem:[#allocation5 + $0x68] sm:$0xff]
    %v110 = vld [vmem:[#allocation5 + $0x70] sm:$0xff]
    %v111 = vld [vmem:[#allocation5 + $0x78] sm:$0xff]
    %v112 = vld [vmem:[#allocation2] sm:$0x1]
    %v113 = vlaneseq
    %v114 = vshrl.u32 %v113, 7
    %v115 = vlaneseq
    %v116 = vshrl.u32 %v115, 7
    %v117 = vsub.s32 0, %v116
    %v118 = vrot.slane %v112, %v117
    %vm119 = vcmp.eq.s32.totalorder %v114, %v118
    %v120 = vsel %vm119, 1, 0
    %v121 = vcvt.s32.f32 %v120
    %122 = vmatprep.subr.mxu0 0.0
    %123 = vmatpush1.msra.mxu0 %v96
    %124 = vmatprep.subr.mxu0 0.0
    %125 = vmatpush1.msra.mxu0 %v97
    %126 = vmatprep.subr.mxu0 0.0
    %127 = vmatpush1.msra.mxu0 %v98
    %128 = vmatprep.subr.mxu0 0.0
    %129 = vmatpush1.msra.mxu0 %v99
    %130 = vmatprep.subr.mxu0 0.0
    %131 = vmatpush1.msra.mxu0 %v100
    %132 = vmatprep.subr.mxu0 0.0
    %133 = vmatpush1.msra.mxu0 %v101
    %134 = vmatprep.subr.mxu0 0.0
    %135 = vmatpush1.msra.mxu0 %v102
    %136 = vmatprep.subr.mxu0 0.0
    %137 = vmatpush1.msra.mxu0 %v103
    %138 = vmatprep.subr.mxu0 0.0
    %139 = vmatpush1.msra.mxu0 %v104
    %140 = vmatprep.subr.mxu0 0.0
    %141 = vmatpush1.msra.mxu0 %v105
    %142 = vmatprep.subr.mxu0 0.0
    %143 = vmatpush1.msra.mxu0 %v106
    %144 = vmatprep.subr.mxu0 0.0
    %145 = vmatpush1.msra.mxu0 %v107
    %146 = vmatprep.subr.mxu0 0.0
    %147 = vmatpush1.msra.mxu0 %v108
    %148 = vmatprep.subr.mxu0 0.0
    %149 = vmatpush1.msra.mxu0 %v109
    %150 = vmatprep.subr.mxu0 0.0
    %151 = vmatpush1.msra.mxu0 %v110
    %152 = vmatprep.subr.mxu0 0.0
    %153 = vmatpush1.msra.mxu0 %v111
    %154 = vmatprep.subr.mxu0 0.0
    %155 = vmatpush1.msra.mxu0 0.0
    %156 = vmatprep.subr.mxu0 0.0
    %157 = vmatpush1.msra.mxu0 0.0
    %158 = vmatprep.subr.mxu0 0.0
    %159 = vmatpush1.msra.mxu0 0.0
    %160 = vmatprep.subr.mxu0 0.0
    %161 = vmatpush1.msra.mxu0 0.0
    %162 = vmatprep.subr.mxu0 0.0
    %163 = vmatpush1.msra.mxu0 0.0
    %164 = vmatprep.subr.mxu0 0.0
    %165 = vmatpush1.msra.mxu0 0.0
    %166 = vmatprep.subr.mxu0 0.0
    %167 = vmatpush1.msra.mxu0 0.0
    %168 = vmatprep.subr.mxu0 0.0
    %169 = vmatpush1.msra.mxu0 0.0
    %170 = vmatprep.subr.mxu0 0.0
    %171 = vmatpush1.msra.mxu0 0.0
    %172 = vmatprep.subr.mxu0 0.0
    %173 = vmatpush1.msra.mxu0 0.0
    %174 = vmatprep.subr.mxu0 0.0
    %175 = vmatpush1.msra.mxu0 0.0
    %176 = vmatprep.subr.mxu0 0.0
    %177 = vmatpush1.msra.mxu0 0.0
    %178 = vmatprep.subr.mxu0 0.0
    %179 = vmatpush1.msra.mxu0 0.0
    %180 = vmatprep.subr.mxu0 0.0
    %181 = vmatpush1.msra.mxu0 0.0
    %182 = vmatprep.subr.mxu0 0.0
    %183 = vmatpush1.msra.mxu0 0.0
    %184 = vmatprep.subr.mxu0 0.0
    %185 = vmatpush1.msra.mxu0 0.0
    %186 = vmatprep.mubr.f32.mxu0 0.0
    %187 = vmatmul.mubr.f32.gmra.mrb[0].mxu0 %v121
    %v188 = vpop.f32.mrb[0].mxu0
    %v189 = vadd.f32 0.0, %v188
    %v190 = vpop.f32.mrb[0].mxu0
    %191 = vdwg.mxu0
    %v192 = vmax.f32 %v189, 1.0
    %v193 = vrcp.pop %v192
    %195 = vset.pattern.permute.xlu0 16
    %196 = vperm.xlu0 %195, %v193
    %v197 = vpop.permute.xlu0 %196
    %v199 = vmul.f32 %v189, %v197
    %v200 = vld [vmem:[#allocation7] sm:$0xff]
    %v201 = vld [vmem:[#allocation7 + $0x8] sm:$0xff]
    %v202 = vld [vmem:[#allocation7 + $0x10] sm:$0xff]
    %v203 = vld [vmem:[#allocation7 + $0x18] sm:$0xff]
    %v204 = vld [vmem:[#allocation7 + $0x20] sm:$0xff]
    %v205 = vld [vmem:[#allocation7 + $0x28] sm:$0xff]
    %v206 = vld [vmem:[#allocation7 + $0x30] sm:$0xff]
    %v207 = vld [vmem:[#allocation7 + $0x38] sm:$0xff]
    %v208 = vld [vmem:[#allocation7 + $0x40] sm:$0xff]
    %v209 = vld [vmem:[#allocation7 + $0x48] sm:$0xff]
    %v210 = vld [vmem:[#allocation7 + $0x50] sm:$0xff]
    %v211 = vld [vmem:[#allocation7 + $0x58] sm:$0xff]
    %v212 = vld [vmem:[#allocation7 + $0x60] sm:$0xff]
    %v213 = vld [vmem:[#allocation7 + $0x68] sm:$0xff]
    %v214 = vld [vmem:[#allocation7 + $0x70] sm:$0xff]
    %v215 = vld [vmem:[#allocation7 + $0x78] sm:$0xff]
    %v216 = vld [vmem:[%s3] sm:$0x1]
    %v218 = vlaneseq
    %v219 = vshrl.u32 %v218, 7
    %v220 = vsub.s32 0, %v219
    %v221 = vrot.slane %v216, %v220
    %223 = vmatprep.subr.mxu0 0.0
    %224 = vmatpush1.msra.mxu0 %v200
    %225 = vmatprep.subr.mxu0 0.0
    %226 = vmatpush1.msra.mxu0 %v201
    %227 = vmatprep.subr.mxu0 0.0
    %228 = vmatpush1.msra.mxu0 %v202
    %229 = vmatprep.subr.mxu0 0.0
    %230 = vmatpush1.msra.mxu0 %v203
    %231 = vmatprep.subr.mxu0 0.0
    %232 = vmatpush1.msra.mxu0 %v204
    %233 = vmatprep.subr.mxu0 0.0
    %234 = vmatpush1.msra.mxu0 %v205
    %235 = vmatprep.subr.mxu0 0.0
    %236 = vmatpush1.msra.mxu0 %v206
    %237 = vmatprep.subr.mxu0 0.0
    %238 = vmatpush1.msra.mxu0 %v207
    %239 = vmatprep.subr.mxu0 0.0
    %240 = vmatpush1.msra.mxu0 %v208
    %241 = vmatprep.subr.mxu0 0.0
    %242 = vmatpush1.msra.mxu0 %v209
    %243 = vmatprep.subr.mxu0 0.0
    %244 = vmatpush1.msra.mxu0 %v210
    %245 = vmatprep.subr.mxu0 0.0
    %246 = vmatpush1.msra.mxu0 %v211
    %247 = vmatprep.subr.mxu0 0.0
    %248 = vmatpush1.msra.mxu0 %v212
    %249 = vmatprep.subr.mxu0 0.0
    %250 = vmatpush1.msra.mxu0 %v213
    %251 = vmatprep.subr.mxu0 0.0
    %252 = vmatpush1.msra.mxu0 %v214
    %253 = vmatprep.subr.mxu0 0.0
    %254 = vmatpush1.msra.mxu0 %v215
    %255 = vmatprep.subr.mxu0 0.0
    %256 = vmatpush1.msra.mxu0 0.0
    %257 = vmatprep.subr.mxu0 0.0
    %258 = vmatpush1.msra.mxu0 0.0
    %259 = vmatprep.subr.mxu0 0.0
    %260 = vmatpush1.msra.mxu0 0.0
    %261 = vmatprep.subr.mxu0 0.0
    %262 = vmatpush1.msra.mxu0 0.0
    %263 = vmatprep.subr.mxu0 0.0
    %264 = vmatpush1.msra.mxu0 0.0
    %265 = vmatprep.subr.mxu0 0.0
    %266 = vmatpush1.msra.mxu0 0.0
    %267 = vmatprep.subr.mxu0 0.0
    %268 = vmatpush1.msra.mxu0 0.0
    %269 = vmatprep.subr.mxu0 0.0
    %270 = vmatpush1.msra.mxu0 0.0
    %271 = vmatprep.subr.mxu0 0.0
    %272 = vmatpush1.msra.mxu0 0.0
    %273 = vmatprep.subr.mxu0 0.0
    %274 = vmatpush1.msra.mxu0 0.0
    %275 = vmatprep.subr.mxu0 0.0
    %276 = vmatpush1.msra.mxu0 0.0
    %277 = vmatprep.subr.mxu0 0.0
    %278 = vmatpush1.msra.mxu0 0.0
    %279 = vmatprep.subr.mxu0 0.0
    %280 = vmatpush1.msra.mxu0 0.0
    %281 = vmatprep.subr.mxu0 0.0
    %282 = vmatpush1.msra.mxu0 0.0
    %283 = vmatprep.subr.mxu0 0.0
    %284 = vmatpush1.msra.mxu0 0.0
    %285 = vmatprep.subr.mxu0 0.0
    %286 = vmatpush1.msra.mxu0 0.0
    %287 = vmatprep.mubr.f32.mxu0 0.0
    %288 = vmatmul.mubr.f32.gmra.mrb[0].mxu0 %v199
    %v289 = vpop.f32.mrb[0].mxu0
    %v290 = vadd.f32 %v221, %v289
    %v291 = vpop.f32.mrb[0].mxu0
    %292 = vdwg.mxu0
    %v293 = vmax.f32 %v290, 0.0
    %v294 = vld [vmem:[#allocation8] sm:$0xff]
    %v295 = vld [vmem:[#allocation8 + $0x8] sm:$0xff]
    %v296 = vld [vmem:[#allocation8 + $0x10] sm:$0xff]
    %v297 = vld [vmem:[#allocation8 + $0x18] sm:$0xff]
    %v298 = vld [vmem:[#allocation8 + $0x20] sm:$0xff]
    %v299 = vld [vmem:[#allocation8 + $0x28] sm:$0xff]
    %v300 = vld [vmem:[#allocation8 + $0x30] sm:$0xff]
    %v301 = vld [vmem:[#allocation8 + $0x38] sm:$0xff]
    %v302 = vld [vmem:[#allocation8 + $0x40] sm:$0xff]
    %v303 = vld [vmem:[#allocation8 + $0x48] sm:$0xff]
    %v304 = vld [vmem:[#allocation8 + $0x50] sm:$0xff]
    %v305 = vld [vmem:[#allocation8 + $0x58] sm:$0xff]
    %v306 = vld [vmem:[#allocation8 + $0x60] sm:$0xff]
    %v307 = vld [vmem:[#allocation8 + $0x68] sm:$0xff]
    %v308 = vld [vmem:[#allocation8 + $0x70] sm:$0xff]
    %v309 = vld [vmem:[#allocation8 + $0x78] sm:$0xff]
    %v310 = vld [vmem:[%s5] sm:$0x1]
    %v312 = vlaneseq
    %v313 = vshrl.u32 %v312, 7
    %v314 = vsub.s32 0, %v313
    %v315 = vrot.slane %v310, %v314
    %317 = vmatprep.subr.mxu0 0.0
    %318 = vmatpush1.msra.mxu0 %v294
    %319 = vmatprep.subr.mxu0 0.0
    %320 = vmatpush1.msra.mxu0 %v295
    %321 = vmatprep.subr.mxu0 0.0
    %322 = vmatpush1.msra.mxu0 %v296
    %323 = vmatprep.subr.mxu0 0.0
    %324 = vmatpush1.msra.mxu0 %v297
    %325 = vmatprep.subr.mxu0 0.0
    %326 = vmatpush1.msra.mxu0 %v298
    %327 = vmatprep.subr.mxu0 0.0
    %328 = vmatpush1.msra.mxu0 %v299
    %329 = vmatprep.subr.mxu0 0.0
    %330 = vmatpush1.msra.mxu0 %v300
    %331 = vmatprep.subr.mxu0 0.0
    %332 = vmatpush1.msra.mxu0 %v301
    %333 = vmatprep.subr.mxu0 0.0
    %334 = vmatpush1.msra.mxu0 %v302
    %335 = vmatprep.subr.mxu0 0.0
    %336 = vmatpush1.msra.mxu0 %v303
    %337 = vmatprep.subr.mxu0 0.0
    %338 = vmatpush1.msra.mxu0 %v304
    %339 = vmatprep.subr.mxu0 0.0
    %340 = vmatpush1.msra.mxu0 %v305
    %341 = vmatprep.subr.mxu0 0.0
    %342 = vmatpush1.msra.mxu0 %v306
    %343 = vmatprep.subr.mxu0 0.0
    %344 = vmatpush1.msra.mxu0 %v307
    %345 = vmatprep.subr.mxu0 0.0
    %346 = vmatpush1.msra.mxu0 %v308
    %347 = vmatprep.subr.mxu0 0.0
    %348 = vmatpush1.msra.mxu0 %v309
    %349 = vmatprep.subr.mxu0 0.0
    %350 = vmatpush1.msra.mxu0 0.0
    %351 = vmatprep.subr.mxu0 0.0
    %352 = vmatpush1.msra.mxu0 0.0
    %353 = vmatprep.subr.mxu0 0.0
    %354 = vmatpush1.msra.mxu0 0.0
    %355 = vmatprep.subr.mxu0 0.0
    %356 = vmatpush1.msra.mxu0 0.0
    %357 = vmatprep.subr.mxu0 0.0
    %358 = vmatpush1.msra.mxu0 0.0
    %359 = vmatprep.subr.mxu0 0.0
    %360 = vmatpush1.msra.mxu0 0.0
    %361 = vmatprep.subr.mxu0 0.0
    %362 = vmatpush1.msra.mxu0 0.0
    %363 = vmatprep.subr.mxu0 0.0
    %364 = vmatpush1.msra.mxu0 0.0
    %365 = vmatprep.subr.mxu0 0.0
    %366 = vmatpush1.msra.mxu0 0.0
    %367 = vmatprep.subr.mxu0 0.0
    %368 = vmatpush1.msra.mxu0 0.0
    %369 = vmatprep.subr.mxu0 0.0
    %370 = vmatpush1.msra.mxu0 0.0
    %371 = vmatprep.subr.mxu0 0.0
    %372 = vmatpush1.msra.mxu0 0.0
    %373 = vmatprep.subr.mxu0 0.0
    %374 = vmatpush1.msra.mxu0 0.0
    %375 = vmatprep.subr.mxu0 0.0
    %376 = vmatpush1.msra.mxu0 0.0
    %377 = vmatprep.subr.mxu0 0.0
    %378 = vmatpush1.msra.mxu0 0.0
    %379 = vmatprep.subr.mxu0 0.0
    %380 = vmatpush1.msra.mxu0 0.0
    %381 = vmatprep.mubr.f32.mxu0 0.0
    %382 = vmatmul.mubr.f32.gmra.mrb[0].mxu0 %v293
    %v383 = vpop.f32.mrb[0].mxu0
    %v384 = vadd.f32 %v315, %v383
    %v385 = vpop.f32.mrb[0].mxu0
    %386 = vdwg.mxu0
    %v387 = vmax.f32 %v384, 0.0
    %v388 = vld [vmem:[#allocation10] sm:$0xff]
    %v389 = vld [vmem:[#allocation10 + $0x8] sm:$0xff]
    %v390 = vld [vmem:[#allocation10 + $0x10] sm:$0xff]
    %v391 = vld [vmem:[#allocation10 + $0x18] sm:$0xff]
    %v392 = vld [vmem:[#allocation10 + $0x20] sm:$0xff]
    %v393 = vld [vmem:[#allocation10 + $0x28] sm:$0xff]
    %v394 = vld [vmem:[#allocation10 + $0x30] sm:$0xff]
    %v395 = vld [vmem:[#allocation10 + $0x38] sm:$0xff]
    %v396 = vld [vmem:[#allocation10 + $0x40] sm:$0xff]
    %v397 = vld [vmem:[#allocation10 + $0x48] sm:$0xff]
    %v398 = vld [vmem:[#allocation10 + $0x50] sm:$0xff]
    %v399 = vld [vmem:[#allocation10 + $0x58] sm:$0xff]
    %v400 = vld [vmem:[#allocation10 + $0x60] sm:$0xff]
    %v401 = vld [vmem:[#allocation10 + $0x68] sm:$0xff]
    %v402 = vld [vmem:[#allocation10 + $0x70] sm:$0xff]
    %v403 = vld [vmem:[#allocation10 + $0x78] sm:$0xff]
    %v404 = vld [vmem:[%s7] sm:$0x1]
    %v406 = vlaneseq
    %v407 = vshrl.u32 %v406, 7
    %v408 = vsub.s32 0, %v407
    %v409 = vrot.slane %v404, %v408
    %411 = vmatprep.subr.mxu0 0.0
    %412 = vmatpush1.msra.mxu0 %v388
    %413 = vmatprep.subr.mxu0 0.0
    %414 = vmatpush1.msra.mxu0 %v389
    %415 = vmatprep.subr.mxu0 0.0
    %416 = vmatpush1.msra.mxu0 %v390
    %417 = vmatprep.subr.mxu0 0.0
    %418 = vmatpush1.msra.mxu0 %v391
    %419 = vmatprep.subr.mxu0 0.0
    %420 = vmatpush1.msra.mxu0 %v392
    %421 = vmatprep.subr.mxu0 0.0
    %422 = vmatpush1.msra.mxu0 %v393
    %423 = vmatprep.subr.mxu0 0.0
    %424 = vmatpush1.msra.mxu0 %v394
    %425 = vmatprep.subr.mxu0 0.0
    %426 = vmatpush1.msra.mxu0 %v395
    %427 = vmatprep.subr.mxu0 0.0
    %428 = vmatpush1.msra.mxu0 %v396
    %429 = vmatprep.subr.mxu0 0.0
    %430 = vmatpush1.msra.mxu0 %v397
    %431 = vmatprep.subr.mxu0 0.0
    %432 = vmatpush1.msra.mxu0 %v398
    %433 = vmatprep.subr.mxu0 0.0
    %434 = vmatpush1.msra.mxu0 %v399
    %435 = vmatprep.subr.mxu0 0.0
    %436 = vmatpush1.msra.mxu0 %v400
    %437 = vmatprep.subr.mxu0 0.0
    %438 = vmatpush1.msra.mxu0 %v401
    %439 = vmatprep.subr.mxu0 0.0
    %440 = vmatpush1.msra.mxu0 %v402
    %441 = vmatprep.subr.mxu0 0.0
    %442 = vmatpush1.msra.mxu0 %v403
    %443 = vmatprep.subr.mxu0 0.0
    %444 = vmatpush1.msra.mxu0 0.0
    %445 = vmatprep.subr.mxu0 0.0
    %446 = vmatpush1.msra.mxu0 0.0
    %447 = vmatprep.subr.mxu0 0.0
    %448 = vmatpush1.msra.mxu0 0.0
    %449 = vmatprep.subr.mxu0 0.0
    %450 = vmatpush1.msra.mxu0 0.0
    %451 = vmatprep.subr.mxu0 0.0
    %452 = vmatpush1.msra.mxu0 0.0
    %453 = vmatprep.subr.mxu0 0.0
    %454 = vmatpush1.msra.mxu0 0.0
    %455 = vmatprep.subr.mxu0 0.0
    %456 = vmatpush1.msra.mxu0 0.0
    %457 = vmatprep.subr.mxu0 0.0
    %458 = vmatpush1.msra.mxu0 0.0
    %459 = vmatprep.subr.mxu0 0.0
    %460 = vmatpush1.msra.mxu0 0.0
    %461 = vmatprep.subr.mxu0 0.0
    %462 = vmatpush1.msra.mxu0 0.0
    %463 = vmatprep.subr.mxu0 0.0
    %464 = vmatpush1.msra.mxu0 0.0
    %465 = vmatprep.subr.mxu0 0.0
    %466 = vmatpush1.msra.mxu0 0.0
    %467 = vmatprep.subr.mxu0 0.0
    %468 = vmatpush1.msra.mxu0 0.0
    %469 = vmatprep.subr.mxu0 0.0
    %470 = vmatpush1.msra.mxu0 0.0
    %471 = vmatprep.subr.mxu0 0.0
    %472 = vmatpush1.msra.mxu0 0.0
    %473 = vmatprep.subr.mxu0 0.0
    %474 = vmatpush1.msra.mxu0 0.0
    %475 = vmatprep.mubr.f32.mxu0 0.0
    %476 = vmatmul.mubr.f32.gmra.mrb[0].mxu0 %v387
    %v477 = vpop.f32.mrb[0].mxu0
    %v478 = vadd.f32 %v409, %v477
    %v479 = vpop.f32.mrb[0].mxu0
    %480 = vdwg.mxu0
    %481 = vmax.xlane.f32.xlu0 %v478
    %v482 = vpop.xlane.xlu0 %481
    %v483 = vsub.f32 %v478, %v482
    %v484 = vmul.f32 %v483, 1.442695
    %v485 = vpow.pop %v484
    %486 = vadd.xlane.f32.xlu0 %v485
    %v487 = vpop.xlane.xlu0 %486
    %v488 = vlog2.pop %v487
    %v489 = vmul.f32 %v488, 0.6931472
    %v490 = vsub.f32 %v483, %v489
    %491 = vst [vmem:[#allocation11] sm:$0xff] %v490
    // Predicated region
    $region54: #{tpu_custom_call.1} parent=1 // pred_check
      _
    $region55: #{tpu_custom_call.1} parent=1 // pred_check_branch
      %493 = sbr.rel (0) target = $region57
    $region56: #{tpu_custom_call.1} parent=1 // pred_region
      %s495 = ssub.s32 128, 128
      %496 = vsyncadd [#allocation4], %s495
      %s498 = sshll.u32 [#allocation11], 4
      %s499 = int_to_ptr.vmem [resolvable:$true] %s498
      %501 = dma.vmem_to_hbm [thread:$0]  %s499, 128, %s8, [#allocation4]
    $region57: #{tpu_custom_call.1} parent=1 // pred_fallthru
      _
    // Predicated region
    $region58: #{tpu_custom_call.1} parent=1 // pred_check
      _
    $region59: #{tpu_custom_call.1} parent=1 // pred_check_branch
      %503 = sbr.rel (0) target = $region61
    $region60: #{tpu_custom_call.1} parent=1 // pred_region
      %504 = dma.done [#allocation4], 128
    $region61: #{tpu_custom_call.1} parent=1 // pred_fallthru
      _
    %505 = vsyncpa [#allocation3], 1
    %506 = vsyncpa [#allocation6], 1
    %507 = vsyncpa [#allocation9], 1
    %508 = vsyncpa [#allocation4], 1

</llo_original>
